<compile_context>
chip_gen: v7x
topology: tpu7x:2x2x1
jax: 0.10.0
libtpu: 0.0.40
codegen_flags: <defaults>
</compile_context>

<pallas_src>
import functools

import jax
import jax.numpy as jnp
from jax.experimental import pallas as pl
from jax.experimental.pallas import tpu as pltpu


def _round_up(x: int, m: int) -> int:
    return ((x + m - 1) // m) * m


def _pick_tile(dim: int, align: int, preferred: tuple) -> int:
    """Pick a tile size: whole (padded) dim if small, else the largest preferred
    candidate dividing it exactly, else the largest candidate (dim gets padded)."""
    d = _round_up(dim, align)
    if d <= preferred[0]:
        return d
    for t in preferred:
        if d % t == 0:
            return t
    return preferred[0]


def _linear_resident_kernel(x_ref, w_ref, b_ref, o_ref):
    # x fully resident in VMEM (constant block across the grid); weight columns stream.
    o_ref[...] = (
        jnp.dot(x_ref[...], w_ref[...], preferred_element_type=jnp.float32)
        + b_ref[...]
    ).astype(o_ref.dtype)


def _linear_tiled_kernel(x_ref, w_ref, b_ref, o_ref, acc_ref):
    # Grid: (M//tm, N//tn, K//tk); K is the reduction axis (last, "arbitrary").
    k = pl.program_id(2)

    @pl.when(k == 0)
    def _():
        acc_ref[...] = jnp.zeros_like(acc_ref)

    acc_ref[...] += jnp.dot(
        x_ref[...], w_ref[...], preferred_element_type=jnp.float32
    )

    @pl.when(k == pl.num_programs(2) - 1)
    def _():
        o_ref[...] = (acc_ref[...] + b_ref[...]).astype(o_ref.dtype)


@functools.partial(jax.jit, static_argnames=("force_general",))
def scaling_layer(x, w, b, *, force_general: bool = False):
    """y = x @ w + b  (w already transposed to (K, N)), matching torch.nn.Linear."""
    M, K = x.shape
    Kw, N = w.shape
    assert K == Kw and b.shape == (N,)
    out_dtype = x.dtype
    itemsize = jnp.dtype(x.dtype).itemsize
    sub = 8 if itemsize == 4 else 16  # sublane packing (f32: 8, bf16/fp16: 16)

    M8 = _round_up(M, sub)
    K128 = _round_up(K, 128)

    # Small-batch fast path: the whole (padded) activation fits comfortably in VMEM.
    use_resident = (not force_general) and (M8 * K128 * itemsize <= (2 << 20))

    if use_resident:
        tn = _pick_tile(N, 128, (512, 384, 256, 128))
        N_pad = _round_up(N, tn)

        x_p = jnp.pad(x, ((0, M8 - M), (0, K128 - K)))
        w_p = jnp.pad(w, ((0, K128 - K), (0, N_pad - N)))
        b_p = jnp.pad(b, (0, N_pad - N)).reshape(1, N_pad)

        out = pl.pallas_call(
            _linear_resident_kernel,
            out_shape=jax.ShapeDtypeStruct((M8, N_pad), out_dtype),
            grid_spec=pltpu.PrefetchScalarGridSpec(
                num_scalar_prefetch=0,
                grid=(N_pad // tn,),
                in_specs=[
                    pl.BlockSpec((M8, K128), lambda j: (0, 0)),  # x: resident block
                    pl.BlockSpec((K128, tn), lambda j: (0, j)),  # streamed weight slab
                    pl.BlockSpec((1, tn), lambda j: (0, j)),     # bias slab
                ],
                out_specs=pl.BlockSpec((M8, tn), lambda j: (0, j)),
            ),
            compiler_params=pltpu.CompilerParams(
                dimension_semantics=("parallel",),
                vmem_limit_bytes=48 << 20,
            ),
        )(x_p, w_p, b_p)
        return out[:M, :N]

    # General tiled path with a K reduction axis and f32 accumulator.
    tm = _pick_tile(M, sub, (256, 128))
    tn = _pick_tile(N, 128, (512, 256, 128))
    tk = _pick_tile(K, 128, (1024, 512, 256, 128))
    M_pad = _round_up(M, tm)
    N_pad = _round_up(N, tn)
    K_pad = _round_up(K, tk)

    x_p = jnp.pad(x, ((0, M_pad - M), (0, K_pad - K)))
    w_p = jnp.pad(w, ((0, K_pad - K), (0, N_pad - N)))
    b_p = jnp.pad(b, (0, N_pad - N)).reshape(1, N_pad)

    out = pl.pallas_call(
        _linear_tiled_kernel,
        out_shape=jax.ShapeDtypeStruct((M_pad, N_pad), out_dtype),
        grid_spec=pltpu.PrefetchScalarGridSpec(
            num_scalar_prefetch=0,
            grid=(M_pad // tm, N_pad // tn, K_pad // tk),
            in_specs=[
                pl.BlockSpec((tm, tk), lambda i, j, k: (i, k)),
                pl.BlockSpec((tk, tn), lambda i, j, k: (k, j)),
                pl.BlockSpec((1, tn), lambda i, j, k: (0, j)),
            ],
            out_specs=pl.BlockSpec((tm, tn), lambda i, j, k: (i, j)),
            scratch_shapes=[pltpu.VMEM((tm, tn), jnp.float32)],
        ),
        compiler_params=pltpu.CompilerParams(
            dimension_semantics=("parallel", "parallel", "arbitrary"),
            vmem_limit_bytes=48 << 20,
        ),
    )(x_p, w_p, b_p)
    return out[:M, :N]


if __name__ == "__main__":
    key = jax.random.PRNGKey(0)
    kx, kw, kb, kx2, kw2, kb2 = jax.random.split(key, 6)
    HI = jax.lax.Precision.HIGHEST

    # Case 1: small batch, non-aligned dims (resident fast path + padding/slicing).
    batch, origin_dim, scaling_dim = 2, 192, 320
    x = jax.random.normal(kx, (batch, origin_dim), dtype=jnp.float32)
    w = jax.random.normal(kw, (origin_dim, scaling_dim), dtype=jnp.float32) * 0.02
    b = jax.random.normal(kb, (scaling_dim,), dtype=jnp.float32) * 0.02

    y = scaling_layer(x, w, b)
    jax.block_until_ready(y)
    y_ref = jnp.dot(x, w, precision=HI) + b
    assert y.shape == (batch, scaling_dim)
    assert jnp.allclose(y, y_ref, atol=1e-3, rtol=1e-3), "mismatch (resident path)"

    # Case 2: general tiled path with a multi-step K reduction (f32 accumulator).
    M2, K2, N2 = 16, 1536, 256
    x2 = jax.random.normal(kx2, (M2, K2), dtype=jnp.float32)
    w2 = jax.random.normal(kw2, (K2, N2), dtype=jnp.float32) * 0.02
    b2 = jax.random.normal(kb2, (N2,), dtype=jnp.float32) * 0.02

    y2 = scaling_layer(x2, w2, b2, force_general=True)
    jax.block_until_ready(y2)
    y2_ref = jnp.dot(x2, w2, precision=HI) + b2
    assert y2.shape == (M2, N2)
    assert jnp.allclose(y2, y2_ref, atol=1e-3, rtol=1e-3), "mismatch (tiled path)"

    print("KERNEL_OK")
</pallas_src>

<mosaic_0001>
module attributes {stable_mosaic.version = 11 : i64} {
  func.func @_linear_resident_kernel(%arg0: i32, %arg1: memref<8x256xf32, #tpu.memory_space<vmem>>, %arg2: memref<256x384xf32, #tpu.memory_space<vmem>>, %arg3: memref<1x384xf32, #tpu.memory_space<vmem>>, %arg4: memref<8x384xf32, #tpu.memory_space<vmem>>) attributes {dimension_semantics = [#tpu.dimension_semantics<parallel>], iteration_bounds = array<i64: 1>, scalar_prefetch = 0 : i64, scratch_operands = 0 : i64, tpu.core_type = #tpu.core_type<tc>, window_params = [{pipeline_mode = #tpu.pipeline_mode<synchronous>, transform_indices = @transform_0, window_bounds = array<i64: 8, 256>}, {transform_indices = @transform_1, window_bounds = array<i64: 256, 384>}, {transform_indices = @transform_2, window_bounds = array<i64: 1, 384>}, {transform_indices = @transform_3, window_bounds = array<i64: 8, 384>}]} {
    %c0 = arith.constant 0 : index
    %c0_0 = arith.constant 0 : index
    %0 = vector.load %arg1[%c0, %c0_0] : memref<8x256xf32, #tpu.memory_space<vmem>>, vector<8x256xf32>
    %c0_1 = arith.constant 0 : index
    %c0_2 = arith.constant 0 : index
    %1 = vector.load %arg2[%c0_1, %c0_2] : memref<256x384xf32, #tpu.memory_space<vmem>>, vector<256x384xf32>
    %cst = arith.constant dense<0.000000e+00> : vector<8x384xf32>
    %2 = tpu.matmul %0, %1, %cst {dimension_numbers = #tpu.dot_dimension_numbers<[1], [0], [0], [1], [0, 0, 1, 1], [], []>} : vector<8x256xf32>, vector<256x384xf32>, vector<8x384xf32> -> vector<8x384xf32>
    %c0_3 = arith.constant 0 : index
    %c0_4 = arith.constant 0 : index
    %3 = vector.load %arg3[%c0_3, %c0_4] : memref<1x384xf32, #tpu.memory_space<vmem>>, vector<1x384xf32>
    %4 = vector.broadcast %3 : vector<1x384xf32> to vector<8x384xf32>
    %5 = arith.addf %2, %4 : vector<8x384xf32>
    %c0_5 = arith.constant 0 : index
    %c0_6 = arith.constant 0 : index
    %6 = vector.load %arg4[%c0_5, %c0_6] : memref<8x384xf32, #tpu.memory_space<vmem>>, vector<8x384xf32>
    tpu.vector_store %arg4[%c0_5, %c0_6], %5 {strides = array<i32>} : memref<8x384xf32, #tpu.memory_space<vmem>>, vector<8x384xf32>,
    return
  }
  func.func @transform_0(%arg0: i32) -> (i32, i32) {
    %c0_i32 = arith.constant 0 : i32
    %c0_i32_0 = arith.constant 0 : i32
    %c0_i32_1 = arith.constant 0 : i32
    return %c0_i32, %c0_i32_0 : i32, i32
  }
  func.func @transform_1(%arg0: i32) -> (i32, i32) {
    %c0_i32 = arith.constant 0 : i32
    %c0_i32_0 = arith.constant 0 : i32
    return %c0_i32, %arg0 : i32, i32
  }
  func.func @transform_2(%arg0: i32) -> (i32, i32) {
    %c0_i32 = arith.constant 0 : i32
    %c0_i32_0 = arith.constant 0 : i32
    return %c0_i32, %arg0 : i32, i32
  }
  func.func @transform_3(%arg0: i32) -> (i32, i32) {
    %c0_i32 = arith.constant 0 : i32
    %c0_i32_0 = arith.constant 0 : i32
    return %c0_i32, %arg0 : i32, i32
  }
}

</mosaic_0001>

<llo_original>
// kernel: scaling_layer.1
$region0: #{scaling_layer.1}
  #allocation0 [shape = 'u32[]', space=smem, size = 0x4, offset = 0x4, fixed_abs, tag = 'smem constant byte address 0x4 - core index']
  #allocation1 [shape = 'u32[144,128]{1,0:T(1,128)}', space=vmem, size = 0x12000, scoped, tag = 'internal scratch']
  %s0 = inlined_call_operand.vmem [shape: f32[8,256], index: 0, kind: input, shape index: {}]
  %s1 = inlined_call_operand.vmem [shape: f32[256,384], index: 1, kind: input, shape index: {}]
  %s2 = inlined_call_operand.vmem [shape: f32[1,384], index: 2, kind: input, shape index: {}]
  %s3 = inlined_call_operand.vmem [shape: f32[8,384], index: 3, kind: output, shape index: {}]
  %s4 = sld [smem:[#allocation0]]
  $region22: #{scaling_layer.1} parent=0
    _
  %s6 = ssub.s32 1, %s4
  %s7 = scalar_select 0, %s6, %s4
  // Predicated region
  $region2: #{scaling_layer.1} parent=0 // pred_check
    _
  $region3: #{scaling_layer.1} parent=0 // pred_check_branch
    %9 = sbr.rel (0) target = $region5
  $region4: #{scaling_layer.1} parent=0 // pred_region
    _
  $region5: #{scaling_layer.1} parent=0 // pred_fallthru
    _
  // Predicated region
  $region6: #{scaling_layer.1} parent=0 // pred_check
    _
  $region7: #{scaling_layer.1} parent=0 // pred_check_branch
    %11 = sbr.rel (0) target = $region9
  $region8: #{scaling_layer.1} parent=0 // pred_region
    _
  $region9: #{scaling_layer.1} parent=0 // pred_fallthru
    _
  // Predicated region
  $region10: #{scaling_layer.1} parent=0 // pred_check
    _
  $region11: #{scaling_layer.1} parent=0 // pred_check_branch
    %13 = sbr.rel (0) target = $region13
  $region12: #{scaling_layer.1} parent=0 // pred_region
    _
  $region13: #{scaling_layer.1} parent=0 // pred_fallthru
    _
  %v14 = vld [vmem:[%s0] sm:$0xff]
  %v15 = vld [vmem:[%s0 + $0x8] sm:$0xff]
  %v16 = vld [vmem:[%s1] sm:$0xff]
  %v17 = vld [vmem:[%s1 + $0x8] sm:$0xff]
  %v18 = vld [vmem:[%s1 + $0x10] sm:$0xff]
  %v19 = vld [vmem:[%s1 + $0x18] sm:$0xff]
  %v20 = vld [vmem:[%s1 + $0x20] sm:$0xff]
  %v21 = vld [vmem:[%s1 + $0x28] sm:$0xff]
  %v22 = vld [vmem:[%s1 + $0x30] sm:$0xff]
  %v23 = vld [vmem:[%s1 + $0x38] sm:$0xff]
  %v24 = vld [vmem:[%s1 + $0x40] sm:$0xff]
  %v25 = vld [vmem:[%s1 + $0x48] sm:$0xff]
  %v26 = vld [vmem:[%s1 + $0x50] sm:$0xff]
  %v27 = vld [vmem:[%s1 + $0x58] sm:$0xff]
  %v28 = vld [vmem:[%s1 + $0x60] sm:$0xff]
  %v29 = vld [vmem:[%s1 + $0x68] sm:$0xff]
  %v30 = vld [vmem:[%s1 + $0x70] sm:$0xff]
  %v31 = vld [vmem:[%s1 + $0x78] sm:$0xff]
  %v32 = vld [vmem:[%s1 + $0x80] sm:$0xff]
  %v33 = vld [vmem:[%s1 + $0x88] sm:$0xff]
  %v34 = vld [vmem:[%s1 + $0x90] sm:$0xff]
  %v35 = vld [vmem:[%s1 + $0x98] sm:$0xff]
  %v36 = vld [vmem:[%s1 + $0xa0] sm:$0xff]
  %v37 = vld [vmem:[%s1 + $0xa8] sm:$0xff]
  %v38 = vld [vmem:[%s1 + $0xb0] sm:$0xff]
  %v39 = vld [vmem:[%s1 + $0xb8] sm:$0xff]
  %v40 = vld [vmem:[%s1 + $0xc0] sm:$0xff]
  %v41 = vld [vmem:[%s1 + $0xc8] sm:$0xff]
  %v42 = vld [vmem:[%s1 + $0xd0] sm:$0xff]
  %v43 = vld [vmem:[%s1 + $0xd8] sm:$0xff]
  %v44 = vld [vmem:[%s1 + $0xe0] sm:$0xff]
  %v45 = vld [vmem:[%s1 + $0xe8] sm:$0xff]
  %v46 = vld [vmem:[%s1 + $0xf0] sm:$0xff]
  %v47 = vld [vmem:[%s1 + $0xf8] sm:$0xff]
  %v48 = vld [vmem:[%s1 + $0x100] sm:$0xff]
  %v49 = vld [vmem:[%s1 + $0x108] sm:$0xff]
  %v50 = vld [vmem:[%s1 + $0x110] sm:$0xff]
  %v51 = vld [vmem:[%s1 + $0x118] sm:$0xff]
  %v52 = vld [vmem:[%s1 + $0x120] sm:$0xff]
  %v53 = vld [vmem:[%s1 + $0x128] sm:$0xff]
  %v54 = vld [vmem:[%s1 + $0x130] sm:$0xff]
  %v55 = vld [vmem:[%s1 + $0x138] sm:$0xff]
  %v56 = vld [vmem:[%s1 + $0x140] sm:$0xff]
  %v57 = vld [vmem:[%s1 + $0x148] sm:$0xff]
  %v58 = vld [vmem:[%s1 + $0x150] sm:$0xff]
  %v59 = vld [vmem:[%s1 + $0x158] sm:$0xff]
  %v60 = vld [vmem:[%s1 + $0x160] sm:$0xff]
  %v61 = vld [vmem:[%s1 + $0x168] sm:$0xff]
  %v62 = vld [vmem:[%s1 + $0x170] sm:$0xff]
  %v63 = vld [vmem:[%s1 + $0x178] sm:$0xff]
  %v64 = vld [vmem:[%s1 + $0x180] sm:$0xff]
  %v65 = vld [vmem:[%s1 + $0x188] sm:$0xff]
  %v66 = vld [vmem:[%s1 + $0x190] sm:$0xff]
  %v67 = vld [vmem:[%s1 + $0x198] sm:$0xff]
  %v68 = vld [vmem:[%s1 + $0x1a0] sm:$0xff]
  %v69 = vld [vmem:[%s1 + $0x1a8] sm:$0xff]
  %v70 = vld [vmem:[%s1 + $0x1b0] sm:$0xff]
  %v71 = vld [vmem:[%s1 + $0x1b8] sm:$0xff]
  %v72 = vld [vmem:[%s1 + $0x1c0] sm:$0xff]
  %v73 = vld [vmem:[%s1 + $0x1c8] sm:$0xff]
  %v74 = vld [vmem:[%s1 + $0x1d0] sm:$0xff]
  %v75 = vld [vmem:[%s1 + $0x1d8] sm:$0xff]
  %v76 = vld [vmem:[%s1 + $0x1e0] sm:$0xff]
  %v77 = vld [vmem:[%s1 + $0x1e8] sm:$0xff]
  %v78 = vld [vmem:[%s1 + $0x1f0] sm:$0xff]
  %v79 = vld [vmem:[%s1 + $0x1f8] sm:$0xff]
  %v80 = vld [vmem:[%s1 + $0x200] sm:$0xff]
  %v81 = vld [vmem:[%s1 + $0x208] sm:$0xff]
  %v82 = vld [vmem:[%s1 + $0x210] sm:$0xff]
  %v83 = vld [vmem:[%s1 + $0x218] sm:$0xff]
  %v84 = vld [vmem:[%s1 + $0x220] sm:$0xff]
  %v85 = vld [vmem:[%s1 + $0x228] sm:$0xff]
  %v86 = vld [vmem:[%s1 + $0x230] sm:$0xff]
  %v87 = vld [vmem:[%s1 + $0x238] sm:$0xff]
  %v88 = vld [vmem:[%s1 + $0x240] sm:$0xff]
  %v89 = vld [vmem:[%s1 + $0x248] sm:$0xff]
  %v90 = vld [vmem:[%s1 + $0x250] sm:$0xff]
  %v91 = vld [vmem:[%s1 + $0x258] sm:$0xff]
  %v92 = vld [vmem:[%s1 + $0x260] sm:$0xff]
  %v93 = vld [vmem:[%s1 + $0x268] sm:$0xff]
  %v94 = vld [vmem:[%s1 + $0x270] sm:$0xff]
  %v95 = vld [vmem:[%s1 + $0x278] sm:$0xff]
  %v96 = vld [vmem:[%s1 + $0x280] sm:$0xff]
  %v97 = vld [vmem:[%s1 + $0x288] sm:$0xff]
  %v98 = vld [vmem:[%s1 + $0x290] sm:$0xff]
  %v99 = vld [vmem:[%s1 + $0x298] sm:$0xff]
  %v100 = vld [vmem:[%s1 + $0x2a0] sm:$0xff]
  %v101 = vld [vmem:[%s1 + $0x2a8] sm:$0xff]
  %v102 = vld [vmem:[%s1 + $0x2b0] sm:$0xff]
  %v103 = vld [vmem:[%s1 + $0x2b8] sm:$0xff]
  %v104 = vld [vmem:[%s1 + $0x2c0] sm:$0xff]
  %v105 = vld [vmem:[%s1 + $0x2c8] sm:$0xff]
  %v106 = vld [vmem:[%s1 + $0x2d0] sm:$0xff]
  %v107 = vld [vmem:[%s1 + $0x2d8] sm:$0xff]
  %v108 = vld [vmem:[%s1 + $0x2e0] sm:$0xff]
  %v109 = vld [vmem:[%s1 + $0x2e8] sm:$0xff]
  %v110 = vld [vmem:[%s1 + $0x2f0] sm:$0xff]
  %v111 = vld [vmem:[%s1 + $0x2f8] sm:$0xff]
  %v112 = vld [vmem:[%s2] sm:$0x7]
  %v114 = vlaneseq
  %v115 = vshrl.u32 %v114, 7
  %v116 = vsub.s32 0, %v115
  %v117 = vrot.slane %v112, %v116
  %v118 = vlaneseq
  %v119 = vshrl.u32 %v118, 7
  %v120 = vsub.s32 1, %v119
  %v121 = vrot.slane %v112, %v120
  %v122 = vlaneseq
  %v123 = vshrl.u32 %v122, 7
  %v124 = vsub.s32 2, %v123
  %v125 = vrot.slane %v112, %v124
  %129 = vmatprep.subr.mxu0 %v17
  %130 = vmatpush1.msra.mxu0 %v16
  %131 = vmatprep.subr.mxu0 %v20
  %132 = vmatpush1.msra.mxu0 %v19
  %133 = vmatprep.subr.mxu0 %v23
  %134 = vmatpush1.msra.mxu0 %v22
  %135 = vmatprep.subr.mxu0 %v26
  %136 = vmatpush1.msra.mxu0 %v25
  %137 = vmatprep.subr.mxu0 %v29
  %138 = vmatpush1.msra.mxu0 %v28
  %139 = vmatprep.subr.mxu0 %v32
  %140 = vmatpush1.msra.mxu0 %v31
  %141 = vmatprep.subr.mxu0 %v35
  %142 = vmatpush1.msra.mxu0 %v34
  %143 = vmatprep.subr.mxu0 %v38
  %144 = vmatpush1.msra.mxu0 %v37
  %145 = vmatprep.subr.mxu0 %v41
  %146 = vmatpush1.msra.mxu0 %v40
  %147 = vmatprep.subr.mxu0 %v44
  %148 = vmatpush1.msra.mxu0 %v43
  %149 = vmatprep.subr.mxu0 %v47
  %150 = vmatpush1.msra.mxu0 %v46
  %151 = vmatprep.subr.mxu0 %v50
  %152 = vmatpush1.msra.mxu0 %v49
  %153 = vmatprep.subr.mxu0 %v53
  %154 = vmatpush1.msra.mxu0 %v52
  %155 = vmatprep.subr.mxu0 %v56
  %156 = vmatpush1.msra.mxu0 %v55
  %157 = vmatprep.subr.mxu0 %v59
  %158 = vmatpush1.msra.mxu0 %v58
  %159 = vmatprep.subr.mxu0 %v62
  %160 = vmatpush1.msra.mxu0 %v61
  %161 = vmatprep.subr.mxu0 %v65
  %162 = vmatpush1.msra.mxu0 %v64
  %163 = vmatprep.subr.mxu0 %v68
  %164 = vmatpush1.msra.mxu0 %v67
  %165 = vmatprep.subr.mxu0 %v71
  %166 = vmatpush1.msra.mxu0 %v70
  %167 = vmatprep.subr.mxu0 %v74
  %168 = vmatpush1.msra.mxu0 %v73
  %169 = vmatprep.subr.mxu0 %v77
  %170 = vmatpush1.msra.mxu0 %v76
  %171 = vmatprep.subr.mxu0 %v80
  %172 = vmatpush1.msra.mxu0 %v79
  %173 = vmatprep.subr.mxu0 %v83
  %174 = vmatpush1.msra.mxu0 %v82
  %175 = vmatprep.subr.mxu0 %v86
  %176 = vmatpush1.msra.mxu0 %v85
  %177 = vmatprep.subr.mxu0 %v89
  %178 = vmatpush1.msra.mxu0 %v88
  %179 = vmatprep.subr.mxu0 %v92
  %180 = vmatpush1.msra.mxu0 %v91
  %181 = vmatprep.subr.mxu0 %v95
  %182 = vmatpush1.msra.mxu0 %v94
  %183 = vmatprep.subr.mxu0 %v98
  %184 = vmatpush1.msra.mxu0 %v97
  %185 = vmatprep.subr.mxu0 %v101
  %186 = vmatpush1.msra.mxu0 %v100
  %187 = vmatprep.subr.mxu0 %v104
  %188 = vmatpush1.msra.mxu0 %v103
  %189 = vmatprep.subr.mxu0 %v107
  %190 = vmatpush1.msra.mxu0 %v106
  %191 = vmatprep.subr.mxu0 %v110
  %192 = vmatpush1.msra.mxu0 %v109
  %193 = vmatprep.mubr.f32.mxu0 %v15
  %194 = vmatmul.mubr.f32.gmra.mrb[0].mxu0 %v14
  %v195 = vpop.f32.mrb[0].mxu0
  %v196 = vadd.f32 %v117, %v195
  %v197 = vpop.f32.mrb[0].mxu0
  %v198 = vadd.f32 %v121, %v197
  %199 = vdwg.mxu0
  %200 = vmatprep.subr.mxu0 0.0
  %201 = vmatpush1.msra.mxu0 %v18
  %202 = vmatprep.subr.mxu0 0.0
  %203 = vmatpush1.msra.mxu0 %v21
  %204 = vmatprep.subr.mxu0 0.0
  %205 = vmatpush1.msra.mxu0 %v24
  %206 = vmatprep.subr.mxu0 0.0
  %207 = vmatpush1.msra.mxu0 %v27
  %208 = vmatprep.subr.mxu0 0.0
  %209 = vmatpush1.msra.mxu0 %v30
  %210 = vmatprep.subr.mxu0 0.0
  %211 = vmatpush1.msra.mxu0 %v33
  %212 = vmatprep.subr.mxu0 0.0
  %213 = vmatpush1.msra.mxu0 %v36
  %214 = vmatprep.subr.mxu0 0.0
  %215 = vmatpush1.msra.mxu0 %v39
  %216 = vmatprep.subr.mxu0 0.0
  %217 = vmatpush1.msra.mxu0 %v42
  %218 = vmatprep.subr.mxu0 0.0
  %219 = vmatpush1.msra.mxu0 %v45
  %220 = vmatprep.subr.mxu0 0.0
  %221 = vmatpush1.msra.mxu0 %v48
  %222 = vmatprep.subr.mxu0 0.0
  %223 = vmatpush1.msra.mxu0 %v51
  %224 = vmatprep.subr.mxu0 0.0
  %225 = vmatpush1.msra.mxu0 %v54
  %226 = vmatprep.subr.mxu0 0.0
  %227 = vmatpush1.msra.mxu0 %v57
  %228 = vmatprep.subr.mxu0 0.0
  %229 = vmatpush1.msra.mxu0 %v60
  %230 = vmatprep.subr.mxu0 0.0
  %231 = vmatpush1.msra.mxu0 %v63
  %232 = vmatprep.subr.mxu0 0.0
  %233 = vmatpush1.msra.mxu0 %v66
  %234 = vmatprep.subr.mxu0 0.0
  %235 = vmatpush1.msra.mxu0 %v69
  %236 = vmatprep.subr.mxu0 0.0
  %237 = vmatpush1.msra.mxu0 %v72
  %238 = vmatprep.subr.mxu0 0.0
  %239 = vmatpush1.msra.mxu0 %v75
  %240 = vmatprep.subr.mxu0 0.0
  %241 = vmatpush1.msra.mxu0 %v78
  %242 = vmatprep.subr.mxu0 0.0
  %243 = vmatpush1.msra.mxu0 %v81
  %244 = vmatprep.subr.mxu0 0.0
  %245 = vmatpush1.msra.mxu0 %v84
  %246 = vmatprep.subr.mxu0 0.0
  %247 = vmatpush1.msra.mxu0 %v87
  %248 = vmatprep.subr.mxu0 0.0
  %249 = vmatpush1.msra.mxu0 %v90
  %250 = vmatprep.subr.mxu0 0.0
  %251 = vmatpush1.msra.mxu0 %v93
  %252 = vmatprep.subr.mxu0 0.0
  %253 = vmatpush1.msra.mxu0 %v96
  %254 = vmatprep.subr.mxu0 0.0
  %255 = vmatpush1.msra.mxu0 %v99
  %256 = vmatprep.subr.mxu0 0.0
  %257 = vmatpush1.msra.mxu0 %v102
  %258 = vmatprep.subr.mxu0 0.0
  %259 = vmatpush1.msra.mxu0 %v105
  %260 = vmatprep.subr.mxu0 0.0
  %261 = vmatpush1.msra.mxu0 %v108
  %262 = vmatprep.subr.mxu0 0.0
  %263 = vmatpush1.msra.mxu0 %v111
  %264 = vmatprep.mubr.f32.mxu0 %v15
  %265 = vmatmul.mubr.f32.gmra.mrb[0].mxu0 %v14
  %v266 = vpop.f32.mrb[0].mxu0
  %v267 = vadd.f32 %v125, %v266
  %v268 = vpop.f32.mrb[0].mxu0
  %269 = vdwg.mxu0
  %270 = vst [vmem:[%s3] sm:$0xff] %v196
  %271 = vst [vmem:[%s3 + $0x8] sm:$0xff] %v198
  %272 = vst [vmem:[%s3 + $0x10] sm:$0xff] %v267
  // Predicated region
  $region14: #{scaling_layer.1} parent=0 // pred_check
    _
  $region15: #{scaling_layer.1} parent=0 // pred_check_branch
    %274 = sbr.rel (0) target = $region17
  $region16: #{scaling_layer.1} parent=0 // pred_region
    _
  $region17: #{scaling_layer.1} parent=0 // pred_fallthru
    _
  // Predicated region
  $region18: #{scaling_layer.1} parent=0 // pred_check
    _
  $region19: #{scaling_layer.1} parent=0 // pred_check_branch
    %276 = sbr.rel (0) target = $region21
  $region20: #{scaling_layer.1} parent=0 // pred_region
    _
  $region21: #{scaling_layer.1} parent=0 // pred_fallthru
    _

</llo_original>
